<compile_context>
chip_gen: v5e
topology: v5e:2x2
jax: 0.10.0
libtpu: 0.0.40
codegen_flags: <defaults>
</compile_context>

<pallas_src>
import jax
import jax.numpy as jnp
from jax import lax
from jax.experimental import pallas as pl
from jax.experimental.pallas import tpu as pltpu


def _round_up(n, m):
    return ((n + m - 1) // m) * m


def _mlp_kernel(x_ref, w1_ref, b1_ref, w2_ref, b2_ref, w3_ref, b3_ref,
                w4_ref, b4_ref, o_ref):
    # x tile arrives as [block_b, 4]; contract its feature dim against the
    # torch-style [out, in] weights so every activation keeps the batch on the
    # 128-lane axis. Matmul operands are bf16, accumulation / bias / ReLU f32.
    x = x_ref[...].astype(jnp.bfloat16)                                # [Bt, 4]

    # h1 = W1 @ x^T  -> [64, Bt]
    h = lax.dot_general(w1_ref[...], x, (((1,), (1,)), ((), ())),
                        preferred_element_type=jnp.float32)
    h = jnp.maximum(h + b1_ref[...], 0.0)

    # h2 = W2 @ h1   -> [128, Bt]
    h = jnp.dot(w2_ref[...], h.astype(jnp.bfloat16),
                preferred_element_type=jnp.float32)
    h = jnp.maximum(h + b2_ref[...], 0.0)

    # h3 = W3 @ h2   -> [64, Bt]
    h = jnp.dot(w3_ref[...], h.astype(jnp.bfloat16),
                preferred_element_type=jnp.float32)
    h = jnp.maximum(h + b3_ref[...], 0.0)

    # out = W4 @ h3  -> [2, Bt]   (lane-dense store: last dim = block_b)
    out = jnp.dot(w4_ref[...], h.astype(jnp.bfloat16),
                  preferred_element_type=jnp.float32)
    o_ref[...] = (out + b4_ref[...]).astype(o_ref.dtype)


def inverse_material_net(x, params, *, block_b=None):
    """Forward pass of InverseMaterialNet via a single Pallas kernel.

    x: [B, 4] float32
    params: dict with w1[64,4] b1[64,1] w2[128,64] b2[128,1] w3[64,128] b3[64,1]
            w4[2,64] b4[2,1]   (torch-style [out, in] weights, column biases)
    returns: [B, 2] float32
    """
    B, F_in = x.shape
    assert F_in == 4

    b_lanes = _round_up(B, 128)

    # Batch tile: lane-dense (multiple of 128), big enough to amortize the
    # ~0.35us/step grid overhead, small enough that per-tile temporaries stay
    # far below the 32 MiB VMEM limit requested below on all generations.
    if block_b is None:
        block_b = 8192
    block_b = min(_round_up(block_b, 128), 16384)
    block_b = min(block_b, b_lanes)
    # Guarantee >= 2 grid programs when the batch allows it, so the "parallel"
    # batch axis can be split across v7x's two TensorCores and DMA overlaps.
    if b_lanes > 128:
        block_b = min(block_b, max(128, _round_up(b_lanes // 2, 128)))

    B_pad = _round_up(B, block_b)
    if B_pad != B:
        x = jnp.pad(x, ((0, B_pad - B), (0, 0)))

    # bf16 matmul operands; biases stay f32 (f32 bias-add / ReLU in-kernel).
    w1 = params["w1"].astype(jnp.bfloat16)
    w2 = params["w2"].astype(jnp.bfloat16)
    w3 = params["w3"].astype(jnp.bfloat16)
    w4 = params["w4"].astype(jnp.bfloat16)
    b1, b2, b3, b4 = params["b1"], params["b2"], params["b3"], params["b4"]

    def param_spec(arr):
        # Whole (tiny) parameter resident in VMEM for every batch tile.
        return pl.BlockSpec(arr.shape, lambda i: (0, 0))

    grid = (B_pad // block_b,)

    out_t = pl.pallas_call(
        _mlp_kernel,
        out_shape=jax.ShapeDtypeStruct((2, B_pad), jnp.float32),
        grid_spec=pltpu.PrefetchScalarGridSpec(
            num_scalar_prefetch=0,
            grid=grid,
            in_specs=[
                pl.BlockSpec((block_b, 4), lambda i: (i, 0)),  # x tile (no wrapper transpose)
                param_spec(w1), param_spec(b1),
                param_spec(w2), param_spec(b2),
                param_spec(w3), param_spec(b3),
                param_spec(w4), param_spec(b4),
            ],
            out_specs=pl.BlockSpec((2, block_b), lambda i: (0, i)),
        ),
        compiler_params=pltpu.CompilerParams(
            dimension_semantics=("parallel",),      # megacore-shardable batch axis
            vmem_limit_bytes=32 * 1024 * 1024,      # headroom on v5e (16 MiB scoped default)
        ),
    )(x, w1, b1, w2, b2, w3, b3, w4, b4)

    return jnp.transpose(out_t[:, :B])              # [B, 2]


def init_params(key):
    """Deterministic init matching torch.nn.Linear defaults; weights [out,in], biases [out,1]."""
    sizes = [(4, 64), (64, 128), (128, 64), (64, 2)]
    params = {}
    keys = jax.random.split(key, 2 * len(sizes))
    for idx, (fan_in, fan_out) in enumerate(sizes):
        bound = 1.0 / jnp.sqrt(fan_in)  # torch default U(-1/sqrt(fan_in), +1/sqrt(fan_in))
        wk, bk = keys[2 * idx], keys[2 * idx + 1]
        params[f"w{idx+1}"] = jax.random.uniform(
            wk, (fan_out, fan_in), jnp.float32, minval=-bound, maxval=bound)
        params[f"b{idx+1}"] = jax.random.uniform(
            bk, (fan_out, 1), jnp.float32, minval=-bound, maxval=bound)
    return params


def _reference_f32(x, params):
    h = jnp.maximum(x @ params["w1"].T + params["b1"].T, 0.0)
    h = jnp.maximum(h @ params["w2"].T + params["b2"].T, 0.0)
    h = jnp.maximum(h @ params["w3"].T + params["b3"].T, 0.0)
    return h @ params["w4"].T + params["b4"].T


if __name__ == "__main__":
    key = jax.random.PRNGKey(0)
    pkey, xkey = jax.random.split(key)

    params = init_params(pkey)
    x = jax.random.normal(xkey, (8, 4), dtype=jnp.float32)  # batch=8, features=4

    fwd = jax.jit(inverse_material_net)
    out = fwd(x, params)
    jax.block_until_ready(out)

    ref = _reference_f32(x, params)
    assert out.shape == (8, 2)
    # bf16 matmul operands (f32 accumulation) -> relaxed tolerance vs f32 reference.
    assert jnp.allclose(out, ref, atol=2e-2, rtol=2e-2), (out, ref)

    print("KERNEL_OK")
</pallas_src>

<mosaic_0001>
module attributes {stable_mosaic.version = 11 : i64} {
  func.func @_mlp_kernel(%arg0: i32, %arg1: memref<128x4xf32, #tpu.memory_space<vmem>>, %arg2: memref<64x4xbf16, #tpu.memory_space<vmem>>, %arg3: memref<64x1xf32, #tpu.memory_space<vmem>>, %arg4: memref<128x64xbf16, #tpu.memory_space<vmem>>, %arg5: memref<128x1xf32, #tpu.memory_space<vmem>>, %arg6: memref<64x128xbf16, #tpu.memory_space<vmem>>, %arg7: memref<64x1xf32, #tpu.memory_space<vmem>>, %arg8: memref<2x64xbf16, #tpu.memory_space<vmem>>, %arg9: memref<2x1xf32, #tpu.memory_space<vmem>>, %arg10: memref<2x128xf32, #tpu.memory_space<vmem>>) attributes {dimension_semantics = [#tpu.dimension_semantics<parallel>], iteration_bounds = array<i64: 1>, scalar_prefetch = 0 : i64, scratch_operands = 0 : i64, tpu.core_type = #tpu.core_type<tc>, window_params = [{transform_indices = @transform_0, window_bounds = array<i64: 128, 4>}, {pipeline_mode = #tpu.pipeline_mode<synchronous>, transform_indices = @transform_1, window_bounds = array<i64: 64, 4>}, {pipeline_mode = #tpu.pipeline_mode<synchronous>, transform_indices = @transform_2, window_bounds = array<i64: 64, 1>}, {pipeline_mode = #tpu.pipeline_mode<synchronous>, transform_indices = @transform_3, window_bounds = array<i64: 128, 64>}, {pipeline_mode = #tpu.pipeline_mode<synchronous>, transform_indices = @transform_4, window_bounds = array<i64: 128, 1>}, {pipeline_mode = #tpu.pipeline_mode<synchronous>, transform_indices = @transform_5, window_bounds = array<i64: 64, 128>}, {pipeline_mode = #tpu.pipeline_mode<synchronous>, transform_indices = @transform_6, window_bounds = array<i64: 64, 1>}, {pipeline_mode = #tpu.pipeline_mode<synchronous>, transform_indices = @transform_7, window_bounds = array<i64: 2, 64>}, {pipeline_mode = #tpu.pipeline_mode<synchronous>, transform_indices = @transform_8, window_bounds = array<i64: 2, 1>}, {transform_indices = @transform_9, window_bounds = array<i64: 2, 128>}]} {
    %c0 = arith.constant 0 : index
    %c0_0 = arith.constant 0 : index
    %0 = vector.load %arg1[%c0, %c0_0] : memref<128x4xf32, #tpu.memory_space<vmem>>, vector<128x4xf32>
    %1 = arith.truncf %0 : vector<128x4xf32> to vector<128x4xbf16>
    %c0_1 = arith.constant 0 : index
    %c0_2 = arith.constant 0 : index
    %2 = vector.load %arg2[%c0_1, %c0_2] : memref<64x4xbf16, #tpu.memory_space<vmem>>, vector<64x4xbf16>
    %cst = arith.constant dense<0.000000e+00> : vector<64x128xf32>
    %3 = tpu.matmul %2, %1, %cst {dimension_numbers = #tpu.dot_dimension_numbers<[1], [1], [0], [0], [0, 0, 1, 0], [], []>} : vector<64x4xbf16>, vector<128x4xbf16>, vector<64x128xf32> -> vector<64x128xf32>
    %c0_3 = arith.constant 0 : index
    %c0_4 = arith.constant 0 : index
    %4 = vector.load %arg3[%c0_3, %c0_4] : memref<64x1xf32, #tpu.memory_space<vmem>>, vector<64x1xf32>
    %5 = vector.broadcast %4 : vector<64x1xf32> to vector<64x128xf32>
    %6 = arith.addf %3, %5 : vector<64x128xf32>
    %cst_5 = arith.constant 0.000000e+00 : f32
    %7 = vector.broadcast %cst_5 : f32 to vector<64x128xf32>
    %8 = arith.maximumf %6, %7 : vector<64x128xf32>
    %c0_6 = arith.constant 0 : index
    %c0_7 = arith.constant 0 : index
    %9 = vector.load %arg4[%c0_6, %c0_7] : memref<128x64xbf16, #tpu.memory_space<vmem>>, vector<128x64xbf16>
    %10 = arith.truncf %8 : vector<64x128xf32> to vector<64x128xbf16>
    %cst_8 = arith.constant dense<0.000000e+00> : vector<128x128xf32>
    %11 = tpu.matmul %9, %10, %cst_8 {dimension_numbers = #tpu.dot_dimension_numbers<[1], [0], [0], [1], [0, 0, 1, 1], [], []>} : vector<128x64xbf16>, vector<64x128xbf16>, vector<128x128xf32> -> vector<128x128xf32>
    %c0_9 = arith.constant 0 : index
    %c0_10 = arith.constant 0 : index
    %12 = vector.load %arg5[%c0_9, %c0_10] : memref<128x1xf32, #tpu.memory_space<vmem>>, vector<128x1xf32>
    %13 = vector.broadcast %12 : vector<128x1xf32> to vector<128x128xf32>
    %14 = arith.addf %11, %13 : vector<128x128xf32>
    %cst_11 = arith.constant 0.000000e+00 : f32
    %15 = vector.broadcast %cst_11 : f32 to vector<128x128xf32>
    %16 = arith.maximumf %14, %15 : vector<128x128xf32>
    %c0_12 = arith.constant 0 : index
    %c0_13 = arith.constant 0 : index
    %17 = vector.load %arg6[%c0_12, %c0_13] : memref<64x128xbf16, #tpu.memory_space<vmem>>, vector<64x128xbf16>
    %18 = arith.truncf %16 : vector<128x128xf32> to vector<128x128xbf16>
    %cst_14 = arith.constant dense<0.000000e+00> : vector<64x128xf32>
    %19 = tpu.matmul %17, %18, %cst_14 {dimension_numbers = #tpu.dot_dimension_numbers<[1], [0], [0], [1], [0, 0, 1, 1], [], []>} : vector<64x128xbf16>, vector<128x128xbf16>, vector<64x128xf32> -> vector<64x128xf32>
    %c0_15 = arith.constant 0 : index
    %c0_16 = arith.constant 0 : index
    %20 = vector.load %arg7[%c0_15, %c0_16] : memref<64x1xf32, #tpu.memory_space<vmem>>, vector<64x1xf32>
    %21 = vector.broadcast %20 : vector<64x1xf32> to vector<64x128xf32>
    %22 = arith.addf %19, %21 : vector<64x128xf32>
    %cst_17 = arith.constant 0.000000e+00 : f32
    %23 = vector.broadcast %cst_17 : f32 to vector<64x128xf32>
    %24 = arith.maximumf %22, %23 : vector<64x128xf32>
    %c0_18 = arith.constant 0 : index
    %c0_19 = arith.constant 0 : index
    %25 = vector.load %arg8[%c0_18, %c0_19] : memref<2x64xbf16, #tpu.memory_space<vmem>>, vector<2x64xbf16>
    %26 = arith.truncf %24 : vector<64x128xf32> to vector<64x128xbf16>
    %cst_20 = arith.constant dense<0.000000e+00> : vector<2x128xf32>
    %27 = tpu.matmul %25, %26, %cst_20 {dimension_numbers = #tpu.dot_dimension_numbers<[1], [0], [0], [1], [0, 0, 1, 1], [], []>} : vector<2x64xbf16>, vector<64x128xbf16>, vector<2x128xf32> -> vector<2x128xf32>
    %c0_21 = arith.constant 0 : index
    %c0_22 = arith.constant 0 : index
    %28 = vector.load %arg9[%c0_21, %c0_22] : memref<2x1xf32, #tpu.memory_space<vmem>>, vector<2x1xf32>
    %29 = vector.broadcast %28 : vector<2x1xf32> to vector<2x128xf32>
    %30 = arith.addf %27, %29 : vector<2x128xf32>
    %c0_23 = arith.constant 0 : index
    %c0_24 = arith.constant 0 : index
    %31 = vector.load %arg10[%c0_23, %c0_24] : memref<2x128xf32, #tpu.memory_space<vmem>>, vector<2x128xf32>
    tpu.vector_store %arg10[%c0_23, %c0_24], %30 {strides = array<i32>} : memref<2x128xf32, #tpu.memory_space<vmem>>, vector<2x128xf32>,
    return
  }
  func.func @transform_0(%arg0: i32) -> (i32, i32) {
    %c0_i32 = arith.constant 0 : i32
    %c0_i32_0 = arith.constant 0 : i32
    return %arg0, %c0_i32 : i32, i32
  }
  func.func @transform_1(%arg0: i32) -> (i32, i32) {
    %c0_i32 = arith.constant 0 : i32
    %c0_i32_0 = arith.constant 0 : i32
    %c0_i32_1 = arith.constant 0 : i32
    return %c0_i32, %c0_i32_0 : i32, i32
  }
  func.func @transform_2(%arg0: i32) -> (i32, i32) {
    %c0_i32 = arith.constant 0 : i32
    %c0_i32_0 = arith.constant 0 : i32
    %c0_i32_1 = arith.constant 0 : i32
    return %c0_i32, %c0_i32_0 : i32, i32
  }
  func.func @transform_3(%arg0: i32) -> (i32, i32) {
    %c0_i32 = arith.constant 0 : i32
    %c0_i32_0 = arith.constant 0 : i32
    %c0_i32_1 = arith.constant 0 : i32
    return %c0_i32, %c0_i32_0 : i32, i32
  }
  func.func @transform_4(%arg0: i32) -> (i32, i32) {
    %c0_i32 = arith.constant 0 : i32
    %c0_i32_0 = arith.constant 0 : i32
    %c0_i32_1 = arith.constant 0 : i32
    return %c0_i32, %c0_i32_0 : i32, i32
  }
  func.func @transform_5(%arg0: i32) -> (i32, i32) {
    %c0_i32 = arith.constant 0 : i32
    %c0_i32_0 = arith.constant 0 : i32
    %c0_i32_1 = arith.constant 0 : i32
    return %c0_i32, %c0_i32_0 : i32, i32
  }
  func.func @transform_6(%arg0: i32) -> (i32, i32) {
    %c0_i32 = arith.constant 0 : i32
    %c0_i32_0 = arith.constant 0 : i32
    %c0_i32_1 = arith.constant 0 : i32
    return %c0_i32, %c0_i32_0 : i32, i32
  }
  func.func @transform_7(%arg0: i32) -> (i32, i32) {
    %c0_i32 = arith.constant 0 : i32
    %c0_i32_0 = arith.constant 0 : i32
    %c0_i32_1 = arith.constant 0 : i32
    return %c0_i32, %c0_i32_0 : i32, i32
  }
  func.func @transform_8(%arg0: i32) -> (i32, i32) {
    %c0_i32 = arith.constant 0 : i32
    %c0_i32_0 = arith.constant 0 : i32
    %c0_i32_1 = arith.constant 0 : i32
    return %c0_i32, %c0_i32_0 : i32, i32
  }
  func.func @transform_9(%arg0: i32) -> (i32, i32) {
    %c0_i32 = arith.constant 0 : i32
    %c0_i32_0 = arith.constant 0 : i32
    return %c0_i32, %arg0 : i32, i32
  }
}

</mosaic_0001>

<llo_original>
// kernel: inverse_material_net.1
$region0: #{inverse_material_net.1}
  #allocation0 [shape = 'u32[]', space=smem, size = 0x4, offset = 0x4, fixed_abs, tag = 'smem constant byte address 0x4 - core index']
  #allocation1 [shape = 'u32[72,128]{1,0:T(1,128)}', space=vmem, size = 0x9000, scoped, tag = 'internal scratch']
  %s0 = inlined_call_operand.vmem [shape: f32[128,4], index: 0, kind: input, shape index: {}]
  %s1 = inlined_call_operand.vmem [shape: bf16[64,4], index: 1, kind: input, shape index: {}]
  %s2 = inlined_call_operand.vmem [shape: f32[64,1], index: 2, kind: input, shape index: {}]
  %s3 = inlined_call_operand.vmem [shape: bf16[128,64], index: 3, kind: input, shape index: {}]
  %s4 = inlined_call_operand.vmem [shape: f32[128,1], index: 4, kind: input, shape index: {}]
  %s5 = inlined_call_operand.vmem [shape: bf16[64,128], index: 5, kind: input, shape index: {}]
  %s6 = inlined_call_operand.vmem [shape: f32[64,1], index: 6, kind: input, shape index: {}]
  %s7 = inlined_call_operand.vmem [shape: bf16[2,64], index: 7, kind: input, shape index: {}]
  %s8 = inlined_call_operand.vmem [shape: f32[2,1], index: 8, kind: input, shape index: {}]
  %s9 = inlined_call_operand.vmem [shape: f32[2,128], index: 9, kind: output, shape index: {}]
  %s10 = sld [smem:[#allocation0]]
  $region46: #{inverse_material_net.1} parent=0
    _
  %s12 = ssub.s32 1, %s10
  %s13 = scalar_select 0, %s12, %s10
  // Predicated region
  $region2: #{inverse_material_net.1} parent=0 // pred_check
    _
  $region3: #{inverse_material_net.1} parent=0 // pred_check_branch
    %15 = sbr.rel (0) target = $region5
  $region4: #{inverse_material_net.1} parent=0 // pred_region
    _
  $region5: #{inverse_material_net.1} parent=0 // pred_fallthru
    _
  // Predicated region
  $region6: #{inverse_material_net.1} parent=0 // pred_check
    _
  $region7: #{inverse_material_net.1} parent=0 // pred_check_branch
    %17 = sbr.rel (0) target = $region9
  $region8: #{inverse_material_net.1} parent=0 // pred_region
    _
  $region9: #{inverse_material_net.1} parent=0 // pred_fallthru
    _
  // Predicated region
  $region10: #{inverse_material_net.1} parent=0 // pred_check
    _
  $region11: #{inverse_material_net.1} parent=0 // pred_check_branch
    %19 = sbr.rel (0) target = $region13
  $region12: #{inverse_material_net.1} parent=0 // pred_region
    _
  $region13: #{inverse_material_net.1} parent=0 // pred_fallthru
    _
  // Predicated region
  $region14: #{inverse_material_net.1} parent=0 // pred_check
    _
  $region15: #{inverse_material_net.1} parent=0 // pred_check_branch
    %21 = sbr.rel (0) target = $region17
  $region16: #{inverse_material_net.1} parent=0 // pred_region
    _
  $region17: #{inverse_material_net.1} parent=0 // pred_fallthru
    _
  // Predicated region
  $region18: #{inverse_material_net.1} parent=0 // pred_check
    _
  $region19: #{inverse_material_net.1} parent=0 // pred_check_branch
    %23 = sbr.rel (0) target = $region21
  $region20: #{inverse_material_net.1} parent=0 // pred_region
    _
  $region21: #{inverse_material_net.1} parent=0 // pred_fallthru
    _
  // Predicated region
  $region22: #{inverse_material_net.1} parent=0 // pred_check
    _
  $region23: #{inverse_material_net.1} parent=0 // pred_check_branch
    %25 = sbr.rel (0) target = $region25
  $region24: #{inverse_material_net.1} parent=0 // pred_region
    _
  $region25: #{inverse_material_net.1} parent=0 // pred_fallthru
    _
  // Predicated region
  $region26: #{inverse_material_net.1} parent=0 // pred_check
    _
  $region27: #{inverse_material_net.1} parent=0 // pred_check_branch
    %27 = sbr.rel (0) target = $region29
  $region28: #{inverse_material_net.1} parent=0 // pred_region
    _
  $region29: #{inverse_material_net.1} parent=0 // pred_fallthru
    _
  // Predicated region
  $region30: #{inverse_material_net.1} parent=0 // pred_check
    _
  $region31: #{inverse_material_net.1} parent=0 // pred_check_branch
    %29 = sbr.rel (0) target = $region33
  $region32: #{inverse_material_net.1} parent=0 // pred_region
    _
  $region33: #{inverse_material_net.1} parent=0 // pred_fallthru
    _
  // Predicated region
  $region34: #{inverse_material_net.1} parent=0 // pred_check
    _
  $region35: #{inverse_material_net.1} parent=0 // pred_check_branch
    %31 = sbr.rel (0) target = $region37
  $region36: #{inverse_material_net.1} parent=0 // pred_region
    _
  $region37: #{inverse_material_net.1} parent=0 // pred_fallthru
    _
  %v33 = vld [vmem:[%s0] sm:$0xff]
  %v34 = vld [vmem:[%s0 + $0x8] sm:$0xff]
  %v35 = vld [vmem:[%s0 + $0x10] sm:$0xff]
  %v36 = vld [vmem:[%s0 + $0x18] sm:$0xff]
  %v37 = vld [vmem:[%s0 + $0x20] sm:$0xff]
  %v38 = vld [vmem:[%s0 + $0x28] sm:$0xff]
  %v39 = vld [vmem:[%s0 + $0x30] sm:$0xff]
  %v40 = vld [vmem:[%s0 + $0x38] sm:$0xff]
  %v41 = vld [vmem:[%s0 + $0x40] sm:$0xff]
  %v42 = vld [vmem:[%s0 + $0x48] sm:$0xff]
  %v43 = vld [vmem:[%s0 + $0x50] sm:$0xff]
  %v44 = vld [vmem:[%s0 + $0x58] sm:$0xff]
  %v45 = vld [vmem:[%s0 + $0x60] sm:$0xff]
  %v46 = vld [vmem:[%s0 + $0x68] sm:$0xff]
  %v47 = vld [vmem:[%s0 + $0x70] sm:$0xff]
  %v48 = vld [vmem:[%s0 + $0x78] sm:$0xff]
  %v49 = vpack.c.bf16 %v34, %v33
  %v50 = vpack.c.bf16 %v36, %v35
  %v51 = vpack.c.bf16 %v38, %v37
  %v52 = vpack.c.bf16 %v40, %v39
  %v53 = vpack.c.bf16 %v42, %v41
  %v54 = vpack.c.bf16 %v44, %v43
  %v55 = vpack.c.bf16 %v46, %v45
  %v56 = vpack.c.bf16 %v48, %v47
  %v57 = vld [vmem:[%s1] sm:$0xf]
  %v58 = vld [vmem:[%s1 + $0x4] sm:$0xf]
  %v59 = vld [vmem:[%s1 + $0x8] sm:$0xf]
  %v60 = vld [vmem:[%s1 + $0xc] sm:$0xf]
  %v61 = vld [vmem:[%s1 + $0x10] sm:$0xf]
  %v62 = vld [vmem:[%s1 + $0x14] sm:$0xf]
  %v63 = vld [vmem:[%s1 + $0x18] sm:$0xf]
  %v64 = vld [vmem:[%s1 + $0x1c] sm:$0xf]
  %v65 = vld [vmem:[%s2] sm:$0xff]
  %v66 = vld [vmem:[%s2 + $0x8] sm:$0xff]
  %v67 = vld [vmem:[%s2 + $0x10] sm:$0xff]
  %v68 = vld [vmem:[%s2 + $0x18] sm:$0xff]
  %v69 = vld [vmem:[%s2 + $0x20] sm:$0xff]
  %v70 = vld [vmem:[%s2 + $0x28] sm:$0xff]
  %v71 = vld [vmem:[%s2 + $0x30] sm:$0xff]
  %v72 = vld [vmem:[%s2 + $0x38] sm:$0xff]
  %74 = vset.pattern.permute.xlu0 0
  %75 = vperm.xlu0 %74, %v65
  %v76 = vpop.permute.xlu0 %75
  %79 = vset.pattern.permute.xlu0 0
  %80 = vperm.xlu0 %79, %v66
  %v81 = vpop.permute.xlu0 %80
  %84 = vset.pattern.permute.xlu0 0
  %85 = vperm.xlu0 %84, %v67
  %v86 = vpop.permute.xlu0 %85
  %89 = vset.pattern.permute.xlu0 0
  %90 = vperm.xlu0 %89, %v68
  %v91 = vpop.permute.xlu0 %90
  %94 = vset.pattern.permute.xlu0 0
  %95 = vperm.xlu0 %94, %v69
  %v96 = vpop.permute.xlu0 %95
  %99 = vset.pattern.permute.xlu0 0
  %100 = vperm.xlu0 %99, %v70
  %v101 = vpop.permute.xlu0 %100
  %104 = vset.pattern.permute.xlu0 0
  %105 = vperm.xlu0 %104, %v71
  %v106 = vpop.permute.xlu0 %105
  %109 = vset.pattern.permute.xlu0 0
  %110 = vperm.xlu0 %109, %v72
  %v111 = vpop.permute.xlu0 %110
  %v121 = vunpack.c.l.b16 %v57
  %v122 = vunpack.c.l.b16 %v58
  %v123 = vunpack.c.l.b16 %v59
  %v124 = vunpack.c.l.b16 %v60
  %v125 = vunpack.c.l.b16 %v61
  %v126 = vunpack.c.l.b16 %v62
  %v127 = vunpack.c.l.b16 %v63
  %v128 = vunpack.c.l.b16 %v64
  %v129 = vpack.c.b16 %v122, %v121
  %v130 = vpack.c.b16 %v124, %v123
  %v131 = vpack.c.b16 %v126, %v125
  %v132 = vpack.c.b16 %v128, %v127
  %vm133 = vcmask 31744
  %v135 = vsel %vm133, %v129, 0
  %v138 = vsel %vm133, %v130, 0
  %v141 = vsel %vm133, %v131, 0
  %v144 = vsel %vm133, %v132, 0
  %v147 = vsel %vm133, %v49, 0
  %v150 = vsel %vm133, %v50, 0
  %v153 = vsel %vm133, %v51, 0
  %v156 = vsel %vm133, %v52, 0
  %v159 = vsel %vm133, %v53, 0
  %v162 = vsel %vm133, %v54, 0
  %v165 = vsel %vm133, %v55, 0
  %v168 = vsel %vm133, %v56, 0
  %170 = vmatpush.bf16.xpose.msra.mxu0 %v168
  %171 = vmatpush.bf16.xpose.msra.mxu0 %v165
  %172 = vmatpush.bf16.xpose.msra.mxu0 %v162
  %173 = vmatpush.bf16.xpose.msra.mxu0 %v159
  %174 = vmatpush.bf16.xpose.msra.mxu0 %v156
  %175 = vmatpush.bf16.xpose.msra.mxu0 %v153
  %176 = vmatpush.bf16.xpose.msra.mxu0 %v150
  %177 = vmatpush.bf16.xpose.msra.mxu0 %v147
  %178 = vmatmul.bf16.gmra.mxu0 %v135
  %v179 = vpop.f32.mrf.mxu0
  %v180 = vadd.f32 %v76, %v179
  %v181 = vpop.f32.mrf.mxu0
  %v182 = vadd.f32 %v81, %v181
  %183 = vmatmul.bf16.gmra.mxu0 %v138
  %v184 = vpop.f32.mrf.mxu0
  %v185 = vadd.f32 %v86, %v184
  %v186 = vpop.f32.mrf.mxu0
  %v187 = vadd.f32 %v91, %v186
  %188 = vmatmul.bf16.gmra.mxu0 %v141
  %v189 = vpop.f32.mrf.mxu0
  %v190 = vadd.f32 %v96, %v189
  %v191 = vpop.f32.mrf.mxu0
  %v192 = vadd.f32 %v101, %v191
  %193 = vmatmul.bf16.gmra.mxu0 %v144
  %v194 = vpop.f32.mrf.mxu0
  %v195 = vadd.f32 %v106, %v194
  %v196 = vpop.f32.mrf.mxu0
  %v197 = vadd.f32 %v111, %v196
  %198 = vdwg.mxu0
  %v199 = vmax.f32 %v180, 0.0
  %v200 = vmax.f32 %v182, 0.0
  %v201 = vmax.f32 %v185, 0.0
  %v202 = vmax.f32 %v187, 0.0
  %v203 = vmax.f32 %v190, 0.0
  %v204 = vmax.f32 %v192, 0.0
  %v205 = vmax.f32 %v195, 0.0
  %v206 = vmax.f32 %v197, 0.0
  %v207 = vld [vmem:[%s3] sm:$0xf]
  %v208 = vld [vmem:[%s3 + $0x4] sm:$0xf]
  %v209 = vld [vmem:[%s3 + $0x8] sm:$0xf]
  %v210 = vld [vmem:[%s3 + $0xc] sm:$0xf]
  %v211 = vld [vmem:[%s3 + $0x10] sm:$0xf]
  %v212 = vld [vmem:[%s3 + $0x14] sm:$0xf]
  %v213 = vld [vmem:[%s3 + $0x18] sm:$0xf]
  %v214 = vld [vmem:[%s3 + $0x1c] sm:$0xf]
  %v215 = vld [vmem:[%s3 + $0x20] sm:$0xf]
  %v216 = vld [vmem:[%s3 + $0x24] sm:$0xf]
  %v217 = vld [vmem:[%s3 + $0x28] sm:$0xf]
  %v218 = vld [vmem:[%s3 + $0x2c] sm:$0xf]
  %v219 = vld [vmem:[%s3 + $0x30] sm:$0xf]
  %v220 = vld [vmem:[%s3 + $0x34] sm:$0xf]
  %v221 = vld [vmem:[%s3 + $0x38] sm:$0xf]
  %v222 = vld [vmem:[%s3 + $0x3c] sm:$0xf]
  %v223 = vpack.c.bf16 %v200, %v199
  %v224 = vpack.c.bf16 %v202, %v201
  %v225 = vpack.c.bf16 %v204, %v203
  %v226 = vpack.c.bf16 %v206, %v205
  %v227 = vld [vmem:[%s4] sm:$0xff]
  %v228 = vld [vmem:[%s4 + $0x8] sm:$0xff]
  %v229 = vld [vmem:[%s4 + $0x10] sm:$0xff]
  %v230 = vld [vmem:[%s4 + $0x18] sm:$0xff]
  %v231 = vld [vmem:[%s4 + $0x20] sm:$0xff]
  %v232 = vld [vmem:[%s4 + $0x28] sm:$0xff]
  %v233 = vld [vmem:[%s4 + $0x30] sm:$0xff]
  %v234 = vld [vmem:[%s4 + $0x38] sm:$0xff]
  %v235 = vld [vmem:[%s4 + $0x40] sm:$0xff]
  %v236 = vld [vmem:[%s4 + $0x48] sm:$0xff]
  %v237 = vld [vmem:[%s4 + $0x50] sm:$0xff]
  %v238 = vld [vmem:[%s4 + $0x58] sm:$0xff]
  %v239 = vld [vmem:[%s4 + $0x60] sm:$0xff]
  %v240 = vld [vmem:[%s4 + $0x68] sm:$0xff]
  %v241 = vld [vmem:[%s4 + $0x70] sm:$0xff]
  %v242 = vld [vmem:[%s4 + $0x78] sm:$0xff]
  %244 = vset.pattern.permute.xlu0 0
  %245 = vperm.xlu0 %244, %v227
  %v246 = vpop.permute.xlu0 %245
  %249 = vset.pattern.permute.xlu0 0
  %250 = vperm.xlu0 %249, %v228
  %v251 = vpop.permute.xlu0 %250
  %254 = vset.pattern.permute.xlu0 0
  %255 = vperm.xlu0 %254, %v229
  %v256 = vpop.permute.xlu0 %255
  %259 = vset.pattern.permute.xlu0 0
  %260 = vperm.xlu0 %259, %v230
  %v261 = vpop.permute.xlu0 %260
  %264 = vset.pattern.permute.xlu0 0
  %265 = vperm.xlu0 %264, %v231
  %v266 = vpop.permute.xlu0 %265
  %269 = vset.pattern.permute.xlu0 0
  %270 = vperm.xlu0 %269, %v232
  %v271 = vpop.permute.xlu0 %270
  %274 = vset.pattern.permute.xlu0 0
  %275 = vperm.xlu0 %274, %v233
  %v276 = vpop.permute.xlu0 %275
  %279 = vset.pattern.permute.xlu0 0
  %280 = vperm.xlu0 %279, %v234
  %v281 = vpop.permute.xlu0 %280
  %284 = vset.pattern.permute.xlu0 0
  %285 = vperm.xlu0 %284, %v235
  %v286 = vpop.permute.xlu0 %285
  %289 = vset.pattern.permute.xlu0 0
  %290 = vperm.xlu0 %289, %v236
  %v291 = vpop.permute.xlu0 %290
  %294 = vset.pattern.permute.xlu0 0
  %295 = vperm.xlu0 %294, %v237
  %v296 = vpop.permute.xlu0 %295
  %299 = vset.pattern.permute.xlu0 0
  %300 = vperm.xlu0 %299, %v238
  %v301 = vpop.permute.xlu0 %300
  %304 = vset.pattern.permute.xlu0 0
  %305 = vperm.xlu0 %304, %v239
  %v306 = vpop.permute.xlu0 %305
  %309 = vset.pattern.permute.xlu0 0
  %310 = vperm.xlu0 %309, %v240
  %v311 = vpop.permute.xlu0 %310
  %314 = vset.pattern.permute.xlu0 0
  %315 = vperm.xlu0 %314, %v241
  %v316 = vpop.permute.xlu0 %315
  %319 = vset.pattern.permute.xlu0 0
  %320 = vperm.xlu0 %319, %v242
  %v321 = vpop.permute.xlu0 %320
  %v339 = vunpack.c.l.b16 %v207
  %v340 = vunpack.c.l.b16 %v208
  %v341 = vunpack.c.l.b16 %v209
  %v342 = vunpack.c.l.b16 %v210
  %v343 = vunpack.c.l.b16 %v211
  %v344 = vunpack.c.l.b16 %v212
  %v345 = vunpack.c.l.b16 %v213
  %v346 = vunpack.c.l.b16 %v214
  %v347 = vunpack.c.l.b16 %v215
  %v348 = vunpack.c.l.b16 %v216
  %v349 = vunpack.c.l.b16 %v217
  %v350 = vunpack.c.l.b16 %v218
  %v351 = vunpack.c.l.b16 %v219
  %v352 = vunpack.c.l.b16 %v220
  %v353 = vunpack.c.l.b16 %v221
  %v354 = vunpack.c.l.b16 %v222
  %v355 = vpack.c.b16 %v340, %v339
  %v356 = vpack.c.b16 %v342, %v341
  %v357 = vpack.c.b16 %v344, %v343
  %v358 = vpack.c.b16 %v346, %v345
  %v359 = vpack.c.b16 %v348, %v347
  %v360 = vpack.c.b16 %v350, %v349
  %v361 = vpack.c.b16 %v352, %v351
  %v362 = vpack.c.b16 %v354, %v353
  %vm363 = vcmask 523264
  %v365 = vsel %vm363, %v355, 0
  %v368 = vsel %vm363, %v356, 0
  %v371 = vsel %vm363, %v357, 0
  %v374 = vsel %vm363, %v358, 0
  %v377 = vsel %vm363, %v359, 0
  %v380 = vsel %vm363, %v360, 0
  %v383 = vsel %vm363, %v361, 0
  %v386 = vsel %vm363, %v362, 0
  %388 = vmatpush.bf16.msra.mxu0 0
  %389 = vmatpush.bf16.msra.mxu0 0
  %390 = vmatpush.bf16.msra.mxu0 0
  %391 = vmatpush.bf16.msra.mxu0 0
  %392 = vmatpush.bf16.msra.mxu0 %v226
  %393 = vmatpush.bf16.msra.mxu0 %v225
  %394 = vmatpush.bf16.msra.mxu0 %v224
  %395 = vmatpush.bf16.msra.mxu0 %v223
  %396 = vmatmul.bf16.gmra.mxu0 %v365
  %v397 = vpop.f32.mrf.mxu0
  %v398 = vadd.f32 %v246, %v397
  %v399 = vpop.f32.mrf.mxu0
  %v400 = vadd.f32 %v251, %v399
  %401 = vmatmul.bf16.gmra.mxu0 %v368
  %v402 = vpop.f32.mrf.mxu0
  %v403 = vadd.f32 %v256, %v402
  %v404 = vpop.f32.mrf.mxu0
  %v405 = vadd.f32 %v261, %v404
  %406 = vmatmul.bf16.gmra.mxu0 %v371
  %v407 = vpop.f32.mrf.mxu0
  %v408 = vadd.f32 %v266, %v407
  %v409 = vpop.f32.mrf.mxu0
  %v410 = vadd.f32 %v271, %v409
  %411 = vmatmul.bf16.gmra.mxu0 %v374
  %v412 = vpop.f32.mrf.mxu0
  %v413 = vadd.f32 %v276, %v412
  %v414 = vpop.f32.mrf.mxu0
  %v415 = vadd.f32 %v281, %v414
  %416 = vmatmul.bf16.gmra.mxu0 %v377
  %v417 = vpop.f32.mrf.mxu0
  %v418 = vadd.f32 %v286, %v417
  %v419 = vpop.f32.mrf.mxu0
  %v420 = vadd.f32 %v291, %v419
  %421 = vmatmul.bf16.gmra.mxu0 %v380
  %v422 = vpop.f32.mrf.mxu0
  %v423 = vadd.f32 %v296, %v422
  %v424 = vpop.f32.mrf.mxu0
  %v425 = vadd.f32 %v301, %v424
  %426 = vmatmul.bf16.gmra.mxu0 %v383
  %v427 = vpop.f32.mrf.mxu0
  %v428 = vadd.f32 %v306, %v427
  %v429 = vpop.f32.mrf.mxu0
  %v430 = vadd.f32 %v311, %v429
  %431 = vmatmul.bf16.gmra.mxu0 %v386
  %v432 = vpop.f32.mrf.mxu0
  %v433 = vadd.f32 %v316, %v432
  %v434 = vpop.f32.mrf.mxu0
  %v435 = vadd.f32 %v321, %v434
  %436 = vdwg.mxu0
  %v437 = vmax.f32 %v398, 0.0
  %v438 = vmax.f32 %v400, 0.0
  %v439 = vmax.f32 %v403, 0.0
  %v440 = vmax.f32 %v405, 0.0
  %v441 = vmax.f32 %v408, 0.0
  %v442 = vmax.f32 %v410, 0.0
  %v443 = vmax.f32 %v413, 0.0
  %v444 = vmax.f32 %v415, 0.0
  %v445 = vmax.f32 %v418, 0.0
  %v446 = vmax.f32 %v420, 0.0
  %v447 = vmax.f32 %v423, 0.0
  %v448 = vmax.f32 %v425, 0.0
  %v449 = vmax.f32 %v428, 0.0
  %v450 = vmax.f32 %v430, 0.0
  %v451 = vmax.f32 %v433, 0.0
  %v452 = vmax.f32 %v435, 0.0
  %v453 = vld [vmem:[%s5] sm:$0xf]
  %v454 = vld [vmem:[%s5 + $0x4] sm:$0xf]
  %v455 = vld [vmem:[%s5 + $0x8] sm:$0xf]
  %v456 = vld [vmem:[%s5 + $0xc] sm:$0xf]
  %v457 = vld [vmem:[%s5 + $0x10] sm:$0xf]
  %v458 = vld [vmem:[%s5 + $0x14] sm:$0xf]
  %v459 = vld [vmem:[%s5 + $0x18] sm:$0xf]
  %v460 = vld [vmem:[%s5 + $0x1c] sm:$0xf]
  %v461 = vpack.c.bf16 %v438, %v437
  %v462 = vpack.c.bf16 %v440, %v439
  %v463 = vpack.c.bf16 %v442, %v441
  %v464 = vpack.c.bf16 %v444, %v443
  %v465 = vpack.c.bf16 %v446, %v445
  %v466 = vpack.c.bf16 %v448, %v447
  %v467 = vpack.c.bf16 %v450, %v449
  %v468 = vpack.c.bf16 %v452, %v451
  %v469 = vld [vmem:[%s6] sm:$0xff]
  %v470 = vld [vmem:[%s6 + $0x8] sm:$0xff]
  %v471 = vld [vmem:[%s6 + $0x10] sm:$0xff]
  %v472 = vld [vmem:[%s6 + $0x18] sm:$0xff]
  %v473 = vld [vmem:[%s6 + $0x20] sm:$0xff]
  %v474 = vld [vmem:[%s6 + $0x28] sm:$0xff]
  %v475 = vld [vmem:[%s6 + $0x30] sm:$0xff]
  %v476 = vld [vmem:[%s6 + $0x38] sm:$0xff]
  %478 = vset.pattern.permute.xlu0 0
  %479 = vperm.xlu0 %478, %v469
  %v480 = vpop.permute.xlu0 %479
  %483 = vset.pattern.permute.xlu0 0
  %484 = vperm.xlu0 %483, %v470
  %v485 = vpop.permute.xlu0 %484
  %488 = vset.pattern.permute.xlu0 0
  %489 = vperm.xlu0 %488, %v471
  %v490 = vpop.permute.xlu0 %489
  %493 = vset.pattern.permute.xlu0 0
  %494 = vperm.xlu0 %493, %v472
  %v495 = vpop.permute.xlu0 %494
  %498 = vset.pattern.permute.xlu0 0
  %499 = vperm.xlu0 %498, %v473
  %v500 = vpop.permute.xlu0 %499
  %503 = vset.pattern.permute.xlu0 0
  %504 = vperm.xlu0 %503, %v474
  %v505 = vpop.permute.xlu0 %504
  %508 = vset.pattern.permute.xlu0 0
  %509 = vperm.xlu0 %508, %v475
  %v510 = vpop.permute.xlu0 %509
  %513 = vset.pattern.permute.xlu0 0
  %514 = vperm.xlu0 %513, %v476
  %v515 = vpop.permute.xlu0 %514
  %v525 = vunpack.c.l.b16 %v453
  %v526 = vunpack.c.l.b16 %v454
  %v527 = vunpack.c.l.b16 %v455
  %v528 = vunpack.c.l.b16 %v456
  %v529 = vunpack.c.l.b16 %v457
  %v530 = vunpack.c.l.b16 %v458
  %v531 = vunpack.c.l.b16 %v459
  %v532 = vunpack.c.l.b16 %v460
  %v533 = vpack.c.b16 %v526, %v525
  %v534 = vpack.c.b16 %v528, %v527
  %v535 = vpack.c.b16 %v530, %v529
  %v536 = vpack.c.b16 %v532, %v531
  %541 = vmatpush.bf16.msra.mxu0 %v468
  %542 = vmatpush.bf16.msra.mxu0 %v467
  %543 = vmatpush.bf16.msra.mxu0 %v466
  %544 = vmatpush.bf16.msra.mxu0 %v465
  %545 = vmatpush.bf16.msra.mxu0 %v464
  %546 = vmatpush.bf16.msra.mxu0 %v463
  %547 = vmatpush.bf16.msra.mxu0 %v462
  %548 = vmatpush.bf16.msra.mxu0 %v461
  %549 = vmatmul.bf16.gmra.mxu0 %v533
  %v550 = vpop.f32.mrf.mxu0
  %v551 = vadd.f32 %v480, %v550
  %v552 = vpop.f32.mrf.mxu0
  %v553 = vadd.f32 %v485, %v552
  %554 = vmatmul.bf16.gmra.mxu0 %v534
  %v555 = vpop.f32.mrf.mxu0
  %v556 = vadd.f32 %v490, %v555
  %v557 = vpop.f32.mrf.mxu0
  %v558 = vadd.f32 %v495, %v557
  %559 = vmatmul.bf16.gmra.mxu0 %v535
  %v560 = vpop.f32.mrf.mxu0
  %v561 = vadd.f32 %v500, %v560
  %v562 = vpop.f32.mrf.mxu0
  %v563 = vadd.f32 %v505, %v562
  %564 = vmatmul.bf16.gmra.mxu0 %v536
  %v565 = vpop.f32.mrf.mxu0
  %v566 = vadd.f32 %v510, %v565
  %v567 = vpop.f32.mrf.mxu0
  %v568 = vadd.f32 %v515, %v567
  %569 = vdwg.mxu0
  %v570 = vmax.f32 %v551, 0.0
  %v571 = vmax.f32 %v553, 0.0
  %v572 = vmax.f32 %v556, 0.0
  %v573 = vmax.f32 %v558, 0.0
  %v574 = vmax.f32 %v561, 0.0
  %v575 = vmax.f32 %v563, 0.0
  %v576 = vmax.f32 %v566, 0.0
  %v577 = vmax.f32 %v568, 0.0
  %v578 = vld [vmem:[%s7] sm:$0x1]
  %v579 = vpack.c.bf16 %v571, %v570
  %v580 = vpack.c.bf16 %v573, %v572
  %v581 = vpack.c.bf16 %v575, %v574
  %v582 = vpack.c.bf16 %v577, %v576
  %v583 = vld [vmem:[%s8] sm:$0x3]
  %585 = vset.pattern.permute.xlu0 0
  %586 = vperm.xlu0 %585, %v583
  %v587 = vpop.permute.xlu0 %586
  %v590 = vsel %vm363, %v578, 0
  %592 = vmatpush.bf16.msra.mxu0 0
  %593 = vmatpush.bf16.msra.mxu0 0
  %594 = vmatpush.bf16.msra.mxu0 0
  %595 = vmatpush.bf16.msra.mxu0 0
  %596 = vmatpush.bf16.msra.mxu0 %v582
  %597 = vmatpush.bf16.msra.mxu0 %v581
  %598 = vmatpush.bf16.msra.mxu0 %v580
  %599 = vmatpush.bf16.msra.mxu0 %v579
  %600 = vmatmul.bf16.gmra.mxu0 %v590
  %v601 = vpop.f32.mrf.mxu0
  %v602 = vadd.f32 %v587, %v601
  %v603 = vpop.f32.mrf.mxu0
  %604 = vdwg.mxu0
  %605 = vst [vmem:[%s9] sm:$0x3] %v602
  // Predicated region
  $region38: #{inverse_material_net.1} parent=0 // pred_check
    _
  $region39: #{inverse_material_net.1} parent=0 // pred_check_branch
    %607 = sbr.rel (0) target = $region41
  $region40: #{inverse_material_net.1} parent=0 // pred_region
    _
  $region41: #{inverse_material_net.1} parent=0 // pred_fallthru
    _
  // Predicated region
  $region42: #{inverse_material_net.1} parent=0 // pred_check
    _
  $region43: #{inverse_material_net.1} parent=0 // pred_check_branch
    %609 = sbr.rel (0) target = $region45
  $region44: #{inverse_material_net.1} parent=0 // pred_region
    _
  $region45: #{inverse_material_net.1} parent=0 // pred_fallthru
    _

</llo_original>
